<compile_context>
chip_gen: v7x
topology: tpu7x:2x2x1
jax: 0.10.0
libtpu: 0.0.40
codegen_flags: <defaults>
</compile_context>

<pallas_src>
import functools

import jax
import jax.numpy as jnp
from jax.experimental import pallas as pl
from jax.experimental.pallas import tpu as pltpu


# ----------------------------------------------------------------------------
# Tiling helpers
# ----------------------------------------------------------------------------
def _pick_tm(M: int, cap: int, min_steps: int = 8) -> int:
    """Row tile: a divisor of M (no padding), multiple of 8, <= cap.

    For large M we also keep at least `min_steps` grid steps so a "parallel"
    grid axis can feed both v7x TensorCores and the pipeline has depth.
    Falls back to one full-extent block if M has no multiple-of-8 divisor.
    """
    if M >= min_steps * 8:
        cap = min(cap, max(8, (M // min_steps) // 8 * 8))
    cap = max(8, min(cap, M))
    start = max(8, cap - (cap % 8))
    for t in range(start, 7, -8):
        if M % t == 0:
            return t
    return M


def _vmem_limit(nbytes: int) -> int:
    # 2x headroom over the estimated tile footprint, clamped to stay well
    # inside v7x's 64 MiB physical VMEM.
    return int(min(max(2 * nbytes, 4 * 1024 * 1024), 48 * 1024 * 1024))


# ----------------------------------------------------------------------------
# Kernel 1 (training): fused mu/logvar projection + per-block column stats.
#   x (tm, H) @ W (H, 2L) + b (1, 2L)  ->  mulv (tm, 2L), stats (1, 2, 2L)
# ----------------------------------------------------------------------------
def _encode_train_kernel(x_ref, w_ref, b_ref, mulv_ref, stats_ref):
    acc = jnp.dot(x_ref[...], w_ref[...], preferred_element_type=jnp.float32)
    acc = acc + b_ref[...].astype(jnp.float32)
    mulv_ref[...] = acc.astype(mulv_ref.dtype)          # lane-dense slab store
    # f32 partial sums over rows for std(mu); the logvar half of the lanes is
    # simply ignored in the wrapper (cheaper than lane-slicing in-kernel).
    s1 = jnp.sum(acc, axis=0, keepdims=True)             # (1, 2L)
    s2 = jnp.sum(acc * acc, axis=0, keepdims=True)        # (1, 2L)
    stats_ref[0] = jnp.concatenate([s1, s2], axis=0)       # (2, 2L)


# ----------------------------------------------------------------------------
# Kernel 1' (eval): f == 1, fuse the sampling epilogue into the projection.
# ----------------------------------------------------------------------------
def _encode_eval_kernel(x_ref, w_ref, b_ref, eps_ref, mulv_ref, out_ref, *,
                        latent_dim):
    acc = jnp.dot(x_ref[...], w_ref[...], preferred_element_type=jnp.float32)
    acc = acc + b_ref[...].astype(jnp.float32)
    mulv_ref[...] = acc.astype(mulv_ref.dtype)
    mu = acc[:, :latent_dim]
    lv = acc[:, latent_dim:]
    out = mu + eps_ref[...].astype(jnp.float32) * jnp.exp(0.5 * lv)
    out_ref[...] = out.astype(out_ref.dtype)


# ----------------------------------------------------------------------------
# Kernel 2 (training): elementwise reparameterised sampling with mu-scaling.
#   sample = f_vec * mu + eps * exp(0.5 * logvar), computed in the model dtype.
# ----------------------------------------------------------------------------
def _sample_kernel(f_ref, mulv_ref, eps_ref, out_ref, *, latent_dim):
    mu = mulv_ref[:, :latent_dim]
    lv = mulv_ref[:, latent_dim:]
    out = f_ref[...] * mu + eps_ref[...] * jnp.exp(0.5 * lv)
    out_ref[...] = out.astype(out_ref.dtype)
    # TODO(synk): when latent_dim < 128 a lane-dense (M*L/W, W) reshape of this
    # purely elementwise stage would avoid masked partial stores on v5e.


# ----------------------------------------------------------------------------
# Wrapper
# ----------------------------------------------------------------------------
def scaled_normal_forward(hidden_states, params, eps, *, des_std,
                          training=True, tm_matmul=512, tm_elementwise=2048):
    """hidden_states (B,S,H) -> (sampled_latents (B,S,L), {'mu','logvar'})."""
    B, S, H = hidden_states.shape
    twoL = params["w"].shape[1]
    L = twoL // 2
    dtype = hidden_states.dtype
    itemsize = jnp.dtype(dtype).itemsize
    M = B * S

    x = hidden_states.reshape(M, H)      # free reshape, no copy
    eps2d = eps.reshape(M, L)

    tm = _pick_tm(M, tm_matmul)
    grid = (M // tm,)
    n_blocks = grid[0]

    w = params["w"]                      # (H, 2L) fused once at init
    b = params["b"]                      # (1, 2L)

    # Constant-index blocks: no point double-buffering them (saves VMEM on v7x).
    w_spec = pl.BlockSpec((H, twoL), lambda i: (0, 0),
                          pipeline_mode=pl.Buffered(1))
    b_spec = pl.BlockSpec((1, twoL), lambda i: (0, 0),
                          pipeline_mode=pl.Buffered(1))

    if training:
        # ---- encode: fused projection + f32 column partial sums ------------
        enc_vmem = (itemsize * (2 * tm * H + H * twoL + twoL + 2 * tm * twoL)
                    + 4 * (tm * twoL + 2 * 2 * twoL))
        mulv, stats = pl.pallas_call(
            _encode_train_kernel,
            out_shape=(
                jax.ShapeDtypeStruct((M, twoL), dtype),
                jax.ShapeDtypeStruct((n_blocks, 2, twoL), jnp.float32),
            ),
            grid_spec=pltpu.PrefetchScalarGridSpec(
                num_scalar_prefetch=0,
                grid=grid,
                in_specs=[
                    pl.BlockSpec((tm, H), lambda i: (i, 0)),   # x tile
                    w_spec,                                     # fused W
                    b_spec,                                     # fused bias
                ],
                out_specs=[
                    pl.BlockSpec((tm, twoL), lambda i: (i, 0)),     # [mu|lv]
                    pl.BlockSpec((1, 2, twoL), lambda i: (i, 0, 0)),  # stats
                ],
            ),
            compiler_params=pltpu.CompilerParams(
                dimension_semantics=("parallel",),
                vmem_limit_bytes=_vmem_limit(enc_vmem)),
            cost_estimate=pl.CostEstimate(
                flops=2 * M * H * twoL + 4 * M * twoL,
                transcendentals=0,
                bytes_accessed=itemsize * (M * H + H * twoL + twoL + M * twoL)
                               + 4 * n_blocks * 2 * twoL),
        )(x, w, b)

        # ---- finalise std(mu) over (batch, seq) from the f32 partials -------
        # population variance (torch.std(..., unbiased=False))
        sum_mu = jnp.sum(stats[:, 0, :L], axis=0)
        sum_mu2 = jnp.sum(stats[:, 1, :L], axis=0)
        mean = sum_mu / M
        var = jnp.maximum(sum_mu2 / M - mean * mean, 0.0)
        std_mu = jnp.sqrt(var)
        f_vec = (des_std / (std_mu + 1e-8)).astype(dtype).reshape(1, L)

        # ---- sample: elementwise reparameterisation (model dtype) -----------
        tm_ew = _pick_tm(M, tm_elementwise)
        grid_ew = (M // tm_ew,)
        smp_vmem = itemsize * (2 * tm_ew * twoL + 4 * tm_ew * L + L)
        sampled2d = pl.pallas_call(
            functools.partial(_sample_kernel, latent_dim=L),
            out_shape=jax.ShapeDtypeStruct((M, L), dtype),
            grid_spec=pltpu.PrefetchScalarGridSpec(
                num_scalar_prefetch=0,
                grid=grid_ew,
                in_specs=[
                    pl.BlockSpec((1, L), lambda i: (0, 0),
                                 pipeline_mode=pl.Buffered(1)),   # f_vec
                    pl.BlockSpec((tm_ew, twoL), lambda i: (i, 0)),  # [mu|lv]
                    pl.BlockSpec((tm_ew, L), lambda i: (i, 0)),     # eps
                ],
                out_specs=pl.BlockSpec((tm_ew, L), lambda i: (i, 0)),
            ),
            compiler_params=pltpu.CompilerParams(
                dimension_semantics=("parallel",),
                vmem_limit_bytes=_vmem_limit(smp_vmem)),
            cost_estimate=pl.CostEstimate(
                flops=4 * M * L,
                transcendentals=M * L,
                bytes_accessed=itemsize * (M * twoL + 2 * M * L + L)),
        )(f_vec, mulv, eps2d)
    else:
        # ---- eval: f == 1 -> single fused encode+sample kernel ---------------
        enc_vmem = (itemsize * (2 * tm * H + H * twoL + twoL + 2 * tm * L
                                + 2 * tm * twoL + 2 * tm * L)
                    + 4 * tm * twoL)
        mulv, sampled2d = pl.pallas_call(
            functools.partial(_encode_eval_kernel, latent_dim=L),
            out_shape=(
                jax.ShapeDtypeStruct((M, twoL), dtype),
                jax.ShapeDtypeStruct((M, L), dtype),
            ),
            grid_spec=pltpu.PrefetchScalarGridSpec(
                num_scalar_prefetch=0,
                grid=grid,
                in_specs=[
                    pl.BlockSpec((tm, H), lambda i: (i, 0)),   # x tile
                    w_spec,
                    b_spec,
                    pl.BlockSpec((tm, L), lambda i: (i, 0)),   # eps
                ],
                out_specs=[
                    pl.BlockSpec((tm, twoL), lambda i: (i, 0)),  # [mu|lv]
                    pl.BlockSpec((tm, L), lambda i: (i, 0)),     # sampled
                ],
            ),
            compiler_params=pltpu.CompilerParams(
                dimension_semantics=("parallel",),
                vmem_limit_bytes=_vmem_limit(enc_vmem)),
            cost_estimate=pl.CostEstimate(
                flops=2 * M * H * twoL + 4 * M * L,
                transcendentals=M * L,
                bytes_accessed=itemsize * (M * H + H * twoL + twoL
                                           + M * twoL + 2 * M * L)),
        )(x, w, b, eps2d)

    mu = mulv[:, :L].reshape(B, S, L)
    logvar = mulv[:, L:].reshape(B, S, L)
    sampled = sampled2d.reshape(B, S, L)
    return sampled, {"mu": mu, "logvar": logvar}


# ----------------------------------------------------------------------------
# Parameter init (deterministic, mimics nn.Linear's U(-1/sqrt(H), 1/sqrt(H)))
# mu / logvar projections are fused ONCE here so forward never concatenates.
# ----------------------------------------------------------------------------
def init_params(key, hidden_dim, latent_dim, dtype=jnp.float32):
    k1, k2, k3, k4 = jax.random.split(key, 4)
    bound = 1.0 / (hidden_dim ** 0.5)
    u = lambda k, shape: jax.random.uniform(k, shape, dtype, -bound, bound)
    w_mu = u(k1, (hidden_dim, latent_dim))
    b_mu = u(k2, (1, latent_dim))
    w_logvar = u(k3, (hidden_dim, latent_dim))
    b_logvar = u(k4, (1, latent_dim))
    return {
        "w": jnp.concatenate([w_mu, w_logvar], axis=1),   # (H, 2L)
        "b": jnp.concatenate([b_mu, b_logvar], axis=1),   # (1, 2L)
    }


# ----------------------------------------------------------------------------
# Pure-JAX reference (for correctness check)
# ----------------------------------------------------------------------------
def reference_forward(hidden_states, params, eps, *, des_std, training=True):
    L = params["w"].shape[1] // 2
    mulv = hidden_states @ params["w"] + params["b"][0]
    mu, logvar = mulv[..., :L], mulv[..., L:]
    if training:
        flat = mu.reshape(-1, L)
        std_mu = jnp.sqrt(jnp.mean((flat - flat.mean(0)) ** 2, axis=0))
        f_vec = des_std / (std_mu + 1e-8)
    else:
        f_vec = 1.0
    sampled = f_vec * mu + eps * jnp.exp(0.5 * logvar)
    return sampled, mu, logvar


# TODO(synk): log_likelihood / regularization_loss / percent_utilisation /
#             statistical_mi operate on ragged python lists of per-batch
#             tensors; they are not part of forward() and are left out.

if __name__ == "__main__":
    B, S, H, L = 2, 8, 32, 16
    des_std = 1.0

    key = jax.random.PRNGKey(0)
    k_x, k_p, k_eps = jax.random.split(key, 3)

    hidden_states = jax.random.normal(k_x, (B, S, H), dtype=jnp.float32)
    params = init_params(k_p, H, L)
    eps = jax.random.normal(k_eps, (B, S, L), dtype=jnp.float32)  # randn_like(mu)

    # ---- training path ----
    sampled, dist_params = scaled_normal_forward(
        hidden_states, params, eps, des_std=des_std, training=True)
    jax.block_until_ready(sampled)
    jax.block_until_ready(dist_params["mu"])
    jax.block_until_ready(dist_params["logvar"])

    ref_sampled, ref_mu, ref_lv = reference_forward(
        hidden_states, params, eps, des_std=des_std, training=True)
    assert jnp.allclose(dist_params["mu"], ref_mu, atol=1e-4, rtol=1e-4)
    assert jnp.allclose(dist_params["logvar"], ref_lv, atol=1e-4, rtol=1e-4)
    assert jnp.allclose(sampled, ref_sampled, atol=1e-4, rtol=1e-4)

    # ---- eval path (f_vec == 1, fused single kernel) ----
    sampled_eval, dist_eval = scaled_normal_forward(
        hidden_states, params, eps, des_std=des_std, training=False)
    jax.block_until_ready(sampled_eval)
    ref_eval, ref_mu_e, ref_lv_e = reference_forward(
        hidden_states, params, eps, des_std=des_std, training=False)
    assert jnp.allclose(dist_eval["mu"], ref_mu_e, atol=1e-4, rtol=1e-4)
    assert jnp.allclose(dist_eval["logvar"], ref_lv_e, atol=1e-4, rtol=1e-4)
    assert jnp.allclose(sampled_eval, ref_eval, atol=1e-4, rtol=1e-4)

    print("KERNEL_OK")
</pallas_src>

<mosaic_0001>
module attributes {stable_mosaic.version = 11 : i64} {
  func.func @_encode_train_kernel(%arg0: i32, %arg1: memref<16x32xf32, #tpu.memory_space<vmem>>, %arg2: memref<32x32xf32, #tpu.memory_space<vmem>>, %arg3: memref<1x32xf32, #tpu.memory_space<vmem>>, %arg4: memref<16x32xf32, #tpu.memory_space<vmem>>, %arg5: memref<1x2x32xf32, #tpu.memory_space<vmem>>) attributes {dimension_semantics = [#tpu.dimension_semantics<parallel>], iteration_bounds = array<i64: 1>, scalar_prefetch = 0 : i64, scratch_operands = 0 : i64, tpu.core_type = #tpu.core_type<tc>, window_params = [{transform_indices = @transform_0, window_bounds = array<i64: 16, 32>}, {pipeline_mode = #tpu.pipeline_mode<synchronous>, transform_indices = @transform_1, window_bounds = array<i64: 32, 32>}, {pipeline_mode = #tpu.pipeline_mode<synchronous>, transform_indices = @transform_2, window_bounds = array<i64: 1, 32>}, {transform_indices = @transform_3, window_bounds = array<i64: 16, 32>}, {transform_indices = @transform_4, window_bounds = array<i64: 1, 2, 32>}]} {
    %c0 = arith.constant 0 : index
    %c0_0 = arith.constant 0 : index
    %0 = vector.load %arg1[%c0, %c0_0] : memref<16x32xf32, #tpu.memory_space<vmem>>, vector<16x32xf32>
    %c0_1 = arith.constant 0 : index
    %c0_2 = arith.constant 0 : index
    %1 = vector.load %arg2[%c0_1, %c0_2] : memref<32x32xf32, #tpu.memory_space<vmem>>, vector<32x32xf32>
    %cst = arith.constant dense<0.000000e+00> : vector<16x32xf32>
    %2 = tpu.matmul %0, %1, %cst {dimension_numbers = #tpu.dot_dimension_numbers<[1], [0], [0], [1], [0, 0, 1, 1], [], []>} : vector<16x32xf32>, vector<32x32xf32>, vector<16x32xf32> -> vector<16x32xf32>
    %c0_3 = arith.constant 0 : index
    %c0_4 = arith.constant 0 : index
    %3 = vector.load %arg3[%c0_3, %c0_4] : memref<1x32xf32, #tpu.memory_space<vmem>>, vector<1x32xf32>
    %4 = vector.broadcast %3 : vector<1x32xf32> to vector<16x32xf32>
    %5 = arith.addf %2, %4 : vector<16x32xf32>
    %c0_5 = arith.constant 0 : index
    %c0_6 = arith.constant 0 : index
    %6 = vector.load %arg4[%c0_5, %c0_6] : memref<16x32xf32, #tpu.memory_space<vmem>>, vector<16x32xf32>
    tpu.vector_store %arg4[%c0_5, %c0_6], %5 {strides = array<i32>} : memref<16x32xf32, #tpu.memory_space<vmem>>, vector<16x32xf32>,
    %cst_7 = arith.constant dense<0.000000e+00> : vector<32xf32>
    %7 = vector.multi_reduction <add>, %5, %cst_7 [0] : vector<16x32xf32> to vector<32xf32>
    %8 = vector.shape_cast %7 : vector<32xf32> to vector<1x32xf32>
    %9 = arith.mulf %5, %5 : vector<16x32xf32>
    %cst_8 = arith.constant dense<0.000000e+00> : vector<32xf32>
    %10 = vector.multi_reduction <add>, %9, %cst_8 [0] : vector<16x32xf32> to vector<32xf32>
    %11 = vector.shape_cast %10 : vector<32xf32> to vector<1x32xf32>
    %12 = tpu.concatenate %8, %11 in 0 : vector<1x32xf32>, vector<1x32xf32> -> vector<2x32xf32>
    %c0_9 = arith.constant 0 : index
    %c0_10 = arith.constant 0 : index
    %c0_11 = arith.constant 0 : index
    %13 = vector.load %arg5[%c0_9, %c0_10, %c0_11] : memref<1x2x32xf32, #tpu.memory_space<vmem>>, vector<1x2x32xf32>
    %14 = vector.shape_cast %13 : vector<1x2x32xf32> to vector<2x32xf32>
    %15 = vector.shape_cast %12 : vector<2x32xf32> to vector<1x2x32xf32>
    tpu.vector_store %arg5[%c0_9, %c0_10, %c0_11], %15 {strides = array<i32>} : memref<1x2x32xf32, #tpu.memory_space<vmem>>, vector<1x2x32xf32>,
    return
  }
  func.func @transform_0(%arg0: i32) -> (i32, i32) {
    %c0_i32 = arith.constant 0 : i32
    %c0_i32_0 = arith.constant 0 : i32
    return %arg0, %c0_i32 : i32, i32
  }
  func.func @transform_1(%arg0: i32) -> (i32, i32) {
    %c0_i32 = arith.constant 0 : i32
    %c0_i32_0 = arith.constant 0 : i32
    %c0_i32_1 = arith.constant 0 : i32
    return %c0_i32, %c0_i32_0 : i32, i32
  }
  func.func @transform_2(%arg0: i32) -> (i32, i32) {
    %c0_i32 = arith.constant 0 : i32
    %c0_i32_0 = arith.constant 0 : i32
    %c0_i32_1 = arith.constant 0 : i32
    return %c0_i32, %c0_i32_0 : i32, i32
  }
  func.func @transform_3(%arg0: i32) -> (i32, i32) {
    %c0_i32 = arith.constant 0 : i32
    %c0_i32_0 = arith.constant 0 : i32
    return %arg0, %c0_i32 : i32, i32
  }
  func.func @transform_4(%arg0: i32) -> (i32, i32, i32) {
    %c0_i32 = arith.constant 0 : i32
    %c0_i32_0 = arith.constant 0 : i32
    %c0_i32_1 = arith.constant 0 : i32
    return %arg0, %c0_i32, %c0_i32_0 : i32, i32, i32
  }
}

</mosaic_0001>

<llo_original>
// kernel: tpu_custom_call.1
$region0: #{tpu_custom_call.1}
  #allocation0 [shape = 'u32[]', space=smem, size = 0x4, offset = 0x4, fixed_abs, tag = 'smem constant byte address 0x4 - core index']
  #allocation1 [shape = 'u32[144,128]{1,0:T(1,128)}', space=vmem, size = 0x12000, scoped, tag = 'internal scratch']
  %s0 = inlined_call_operand.hbm [shape: f32[16,32], index: 0, kind: input, shape index: {}]
  %s1 = inlined_call_operand.hbm [shape: f32[32,32], index: 1, kind: input, shape index: {}]
  %s2 = inlined_call_operand.vmem [shape: f32[1,32], index: 2, kind: input, shape index: {}]
  %s3 = inlined_call_operand.hbm [shape: f32[16,32], index: 3, kind: output, shape index: {0}]
  %s4 = inlined_call_operand.hbm [shape: f32[1,2,32], index: 4, kind: output, shape index: {1}]
  %5 = xla_tuple %s3, %s4
  %s6 = sld [smem:[#allocation0]]
  $region38: #{tpu_custom_call.1} parent=0
    _
  %s8 = ssub.s32 1, %s6
  %s9 = scalar_select 0, %s8, %s6
  $region1: #{tpu_custom_call.1} parent=0
    #allocation2 [shape = 'u8[8192]{0}', space=vmem, size = 0x2000, scoped, tag = 'input window, operand 0, single buffered']
    #allocation3 [shape = 's32[1]{0}', space=sflag, size = 0x4, scoped, tag = 'scoped memory for tpu_custom_call.1']
    #allocation4 [shape = 's32[1]{0}', space=sflag, size = 0x4, scoped, tag = 'scoped memory for tpu_custom_call.1']
    #allocation5 [shape = 'u8[16384]{0}', space=vmem, size = 0x4000, scoped, tag = 'input window, operand 1, single buffered']
    #allocation6 [shape = 's32[1]{0}', space=sflag, size = 0x4, scoped, tag = 'scoped memory for tpu_custom_call.1']
    #allocation7 [shape = 'u8[8192]{0}', space=vmem, size = 0x2000, scoped, tag = 'output window, operand 0, single buffered']
    #allocation8 [shape = 'u8[1024]{0}', space=vmem, size = 0x400, scoped, tag = 'output window, operand 1, single buffered']
    #allocation9 [shape = 's32[1]{0}', space=sflag, size = 0x4, scoped, tag = 'scoped memory for tpu_custom_call.1']
    %10 = vsyncpa [#allocation3], 0
    %11 = vsyncpa [#allocation6], 0
    %12 = vsyncpa [#allocation4], 0
    %13 = vsyncpa [#allocation9], 0
    // Predicated region
    $region2: #{tpu_custom_call.1} parent=1 // pred_check
      _
    $region3: #{tpu_custom_call.1} parent=1 // pred_check_branch
      %15 = sbr.rel (0) target = $region5
    $region4: #{tpu_custom_call.1} parent=1 // pred_region
      %s17 = ssub.s32 256, 256
      %18 = vsyncadd [#allocation3], %s17
      %s19 = sshll.u32 [#allocation2], 4
      %s20 = int_to_ptr.vmem [resolvable:$true] %s19
      %25 = dma.hbm_to_vmem [thread:$0]  %s0, 256, %s20, [#allocation3], 128, 128, 8
    $region5: #{tpu_custom_call.1} parent=1 // pred_fallthru
      _
    // Predicated region
    $region6: #{tpu_custom_call.1} parent=1 // pred_check
      _
    $region7: #{tpu_custom_call.1} parent=1 // pred_check_branch
      %27 = sbr.rel (0) target = $region9
    $region8: #{tpu_custom_call.1} parent=1 // pred_region
      %s29 = ssub.s32 512, 512
      %30 = vsyncadd [#allocation6], %s29
      %s31 = sshll.u32 [#allocation5], 4
      %s32 = int_to_ptr.vmem [resolvable:$true] %s31
      %37 = dma.hbm_to_vmem [thread:$0]  %s1, 512, %s32, [#allocation6], 128, 128, 8
    $region9: #{tpu_custom_call.1} parent=1 // pred_fallthru
      _
    // Predicated region
    $region10: #{tpu_custom_call.1} parent=1 // pred_check
      _
    $region11: #{tpu_custom_call.1} parent=1 // pred_check_branch
      %39 = sbr.rel (0) target = $region13
    $region12: #{tpu_custom_call.1} parent=1 // pred_region
      _
    $region13: #{tpu_custom_call.1} parent=1 // pred_fallthru
      _
    // Predicated region
    $region14: #{tpu_custom_call.1} parent=1 // pred_check
      _
    $region15: #{tpu_custom_call.1} parent=1 // pred_check_branch
      %41 = sbr.rel (0) target = $region17
    $region16: #{tpu_custom_call.1} parent=1 // pred_region
      %42 = dma.done [#allocation3], 256
    $region17: #{tpu_custom_call.1} parent=1 // pred_fallthru
      _
    // Predicated region
    $region18: #{tpu_custom_call.1} parent=1 // pred_check
      _
    $region19: #{tpu_custom_call.1} parent=1 // pred_check_branch
      %44 = sbr.rel (0) target = $region21
    $region20: #{tpu_custom_call.1} parent=1 // pred_region
      %45 = dma.done [#allocation6], 512
    $region21: #{tpu_custom_call.1} parent=1 // pred_fallthru
      _
    %v46 = vld [vmem:[#allocation2] sm:$0xff]
    %v47 = vld [vmem:[#allocation2 + $0x8] sm:$0xff]
    %v48 = vld [vmem:[#allocation5] sm:$0xff]
    %v49 = vld [vmem:[#allocation5 + $0x8] sm:$0xff]
    %v50 = vld [vmem:[#allocation5 + $0x10] sm:$0xff]
    %v51 = vld [vmem:[#allocation5 + $0x18] sm:$0xff]
    %v52 = vld [vmem:[%s2] sm:$0x1]
    %v54 = vlaneseq
    %v55 = vshrl.u32 %v54, 7
    %v56 = vsub.s32 0, %v55
    %v57 = vrot.slane %v52, %v56
    %vm59 = vcmask 261120
    %v61 = vsel %vm59, %v46, 0
    %v64 = vsel %vm59, %v47, 0
    %66 = vmatprep.subr.mxu0 0.0
    %67 = vmatpush1.msra.mxu0 %v48
    %68 = vmatprep.subr.mxu0 0.0
    %69 = vmatpush1.msra.mxu0 %v49
    %70 = vmatprep.subr.mxu0 0.0
    %71 = vmatpush1.msra.mxu0 %v50
    %72 = vmatprep.subr.mxu0 0.0
    %73 = vmatpush1.msra.mxu0 %v51
    %74 = vmatprep.subr.mxu0 0.0
    %75 = vmatpush1.msra.mxu0 0.0
    %76 = vmatprep.subr.mxu0 0.0
    %77 = vmatpush1.msra.mxu0 0.0
    %78 = vmatprep.subr.mxu0 0.0
    %79 = vmatpush1.msra.mxu0 0.0
    %80 = vmatprep.subr.mxu0 0.0
    %81 = vmatpush1.msra.mxu0 0.0
    %82 = vmatprep.subr.mxu0 0.0
    %83 = vmatpush1.msra.mxu0 0.0
    %84 = vmatprep.subr.mxu0 0.0
    %85 = vmatpush1.msra.mxu0 0.0
    %86 = vmatprep.subr.mxu0 0.0
    %87 = vmatpush1.msra.mxu0 0.0
    %88 = vmatprep.subr.mxu0 0.0
    %89 = vmatpush1.msra.mxu0 0.0
    %90 = vmatprep.subr.mxu0 0.0
    %91 = vmatpush1.msra.mxu0 0.0
    %92 = vmatprep.subr.mxu0 0.0
    %93 = vmatpush1.msra.mxu0 0.0
    %94 = vmatprep.subr.mxu0 0.0
    %95 = vmatpush1.msra.mxu0 0.0
    %96 = vmatprep.subr.mxu0 0.0
    %97 = vmatpush1.msra.mxu0 0.0
    %98 = vmatprep.subr.mxu0 0.0
    %99 = vmatpush1.msra.mxu0 0.0
    %100 = vmatprep.subr.mxu0 0.0
    %101 = vmatpush1.msra.mxu0 0.0
    %102 = vmatprep.subr.mxu0 0.0
    %103 = vmatpush1.msra.mxu0 0.0
    %104 = vmatprep.subr.mxu0 0.0
    %105 = vmatpush1.msra.mxu0 0.0
    %106 = vmatprep.subr.mxu0 0.0
    %107 = vmatpush1.msra.mxu0 0.0
    %108 = vmatprep.subr.mxu0 0.0
    %109 = vmatpush1.msra.mxu0 0.0
    %110 = vmatprep.subr.mxu0 0.0
    %111 = vmatpush1.msra.mxu0 0.0
    %112 = vmatprep.subr.mxu0 0.0
    %113 = vmatpush1.msra.mxu0 0.0
    %114 = vmatprep.subr.mxu0 0.0
    %115 = vmatpush1.msra.mxu0 0.0
    %116 = vmatprep.subr.mxu0 0.0
    %117 = vmatpush1.msra.mxu0 0.0
    %118 = vmatprep.subr.mxu0 0.0
    %119 = vmatpush1.msra.mxu0 0.0
    %120 = vmatprep.subr.mxu0 0.0
    %121 = vmatpush1.msra.mxu0 0.0
    %122 = vmatprep.subr.mxu0 0.0
    %123 = vmatpush1.msra.mxu0 0.0
    %124 = vmatprep.subr.mxu0 0.0
    %125 = vmatpush1.msra.mxu0 0.0
    %126 = vmatprep.subr.mxu0 0.0
    %127 = vmatpush1.msra.mxu0 0.0
    %128 = vmatprep.subr.mxu0 0.0
    %129 = vmatpush1.msra.mxu0 0.0
    %130 = vmatprep.mubr.f32.mxu0 0.0
    %131 = vmatmul.mubr.f32.gmra.mrb[0].mxu0 %v61
    %v132 = vpop.f32.mrb[0].mxu0
    %v133 = vadd.f32 %v57, %v132
    %v134 = vpop.f32.mrb[0].mxu0
    %135 = vmatprep.mubr.f32.mxu0 0.0
    %136 = vmatmul.mubr.f32.gmra.mrb[0].mxu0 %v64
    %v137 = vpop.f32.mrb[0].mxu0
    %v138 = vadd.f32 %v57, %v137
    %v139 = vpop.f32.mrb[0].mxu0
    %140 = vdwg.mxu0
    %141 = vst.msk [vmem:[#allocation7] sm:$0xff] %vm59, %v133
    %142 = vst.msk [vmem:[#allocation7 + $0x8] sm:$0xff] %vm59, %v138
    %v143 = vsel %vm59, %v133, 0.0
    %v144 = vsel %vm59, %v138, 0.0
    %v145 = vadd.f32 %v143, %v144
    %v146 = vrot.slane %v145, 4
    %v147 = vadd.f32 %v145, %v146
    %v148 = vrot.slane %v147, 2
    %v149 = vadd.f32 %v147, %v148
    %v150 = vrot.slane %v149, 1
    %v151 = vadd.f32 %v149, %v150
    %v152 = vmul.f32 %v133, %v133
    %v153 = vmul.f32 %v138, %v138
    %v154 = vsel %vm59, %v152, 0.0
    %v155 = vsel %vm59, %v153, 0.0
    %v156 = vadd.f32 %v154, %v155
    %v157 = vrot.slane %v156, 4
    %v158 = vadd.f32 %v156, %v157
    %v159 = vrot.slane %v158, 2
    %v160 = vadd.f32 %v158, %v159
    %v161 = vrot.slane %v160, 1
    %v162 = vadd.f32 %v160, %v161
    %vm163 = vcmask 1040384
    %v164 = vsel %vm163, %v151, %v162
    %vm165 = vcmask 254976
    %166 = vst.msk [vmem:[#allocation8] sm:$0x3] %vm165, %v164
    // Predicated region
    $region22: #{tpu_custom_call.1} parent=1 // pred_check
      _
    $region23: #{tpu_custom_call.1} parent=1 // pred_check_branch
      %168 = sbr.rel (0) target = $region25
    $region24: #{tpu_custom_call.1} parent=1 // pred_region
      %s170 = ssub.s32 256, 256
      %171 = vsyncadd [#allocation4], %s170
      %s172 = sshll.u32 [#allocation7], 4
      %s173 = int_to_ptr.vmem [resolvable:$true] %s172
      %178 = dma.vmem_to_hbm [thread:$0]  %s173, 256, %s3, [#allocation4], 128, 128, 8
    $region25: #{tpu_custom_call.1} parent=1 // pred_fallthru
      _
    // Predicated region
    $region26: #{tpu_custom_call.1} parent=1 // pred_check
      _
    $region27: #{tpu_custom_call.1} parent=1 // pred_check_branch
      %180 = sbr.rel (0) target = $region29
    $region28: #{tpu_custom_call.1} parent=1 // pred_region
      %s182 = ssub.s32 32, 32
      %183 = vsyncadd [#allocation9], %s182
      %s185 = sshll.u32 [#allocation8], 4
      %s186 = int_to_ptr.vmem [resolvable:$true] %s185
      %188 = dma.vmem_to_hbm [thread:$0]  %s186, 32, %s4, [#allocation9]
    $region29: #{tpu_custom_call.1} parent=1 // pred_fallthru
      _
    // Predicated region
    $region30: #{tpu_custom_call.1} parent=1 // pred_check
      _
    $region31: #{tpu_custom_call.1} parent=1 // pred_check_branch
      %190 = sbr.rel (0) target = $region33
    $region32: #{tpu_custom_call.1} parent=1 // pred_region
      %191 = dma.done [#allocation4], 256
    $region33: #{tpu_custom_call.1} parent=1 // pred_fallthru
      _
    // Predicated region
    $region34: #{tpu_custom_call.1} parent=1 // pred_check
      _
    $region35: #{tpu_custom_call.1} parent=1 // pred_check_branch
      %193 = sbr.rel (0) target = $region37
    $region36: #{tpu_custom_call.1} parent=1 // pred_region
      %194 = dma.done [#allocation9], 32
    $region37: #{tpu_custom_call.1} parent=1 // pred_fallthru
      _
    %195 = vsyncpa [#allocation3], 1
    %196 = vsyncpa [#allocation6], 1
    %197 = vsyncpa [#allocation4], 1
    %198 = vsyncpa [#allocation9], 1

</llo_original>
